<compile_context>
chip_gen: v5e
topology: v5e:2x2
jax: 0.10.0
libtpu: 0.0.40
codegen_flags: <defaults>
</compile_context>

<pallas_src>
from functools import partial

import jax
import jax.numpy as jnp
from jax.experimental import pallas as pl
from jax.experimental.pallas import tpu as pltpu

# --- config (WindowConvolutionFrontendV1Config) ---
INPUT_DIM = 32      # F
OUTPUT_DIM = 64     # F'
KERNEL_SIZE = 5     # K
STRIDE = 2
DROPOUT = 0.1       # inference: identity
# activation = ReLU (deterministic choice for cfg.activation)

LANES = 128


def _window_conv_kernel(x_ref, w_ref, b_ref, o_ref, *, n_sb):
    """One M-tile of packed output rows per grid step.

    x_ref: [tm + n_sb - 1, GF]   lane-folded input rows (with halo), compute dtype
    w_ref: [n_sb, GF, PO]        packed conv weight, compute dtype
    b_ref: [1, PO]               packed bias (f32)
    o_ref: [tm, PO]              packed output
    """
    tm = o_ref.shape[0]
    po = o_ref.shape[1]

    acc = jnp.zeros((tm, po), jnp.float32)
    # Static unrolled loop over the few folded taps; each tap is a contiguous
    # sublane slice matmul'd against a lane-dense packed weight.
    for j in range(n_sb):
        acc = acc + jnp.dot(x_ref[j:j + tm, :], w_ref[j],
                            preferred_element_type=jnp.float32)

    acc = acc + b_ref[...]               # bias (f32), broadcast over rows
    acc = jnp.maximum(acc, 0.0)          # activation = ReLU
    # dropout: identity (inference / eval mode)
    o_ref[...] = acc.astype(o_ref.dtype)


def window_convolution_frontend(x, sequence_mask, weight, bias, *, kernel_size,
                                stride, compute_dtype=jnp.bfloat16, tile_rows=128):
    """x: [B, T, F] f32, sequence_mask: [B, T] bool,
    weight: [O, F, K] (torch Conv1d layout), bias: [O].
    Returns (out [B, T', O], mask [B, T''])."""
    B, T, F = x.shape
    O = weight.shape[0]
    out_dtype = x.dtype

    # --- same padding along time (apply_same_padding) ---
    left = (kernel_size - 1) // 2
    t_pad = T + kernel_size - 1
    t_out = (t_pad - kernel_size) // stride + 1

    # --- stride/pack folding parameters ---
    pack = max(1, LANES // O)        # output frames packed per lane-dense output row
    fold = pack * stride             # input frames folded into the lane dim
    gf = fold * F                    # folded input lane width   (= 128 for this cfg)
    po = pack * O                    # packed output lane width  (= 128 for this cfg)
    # folded input rows ("super blocks") each packed output row touches
    n_sb = ((pack - 1) * stride + kernel_size - 1) // fold + 1
    halo = n_sb - 1

    t_out_packed = pl.cdiv(t_out, pack)          # packed output rows per batch
    t_sb = t_out_packed + halo                   # folded input rows per batch

    # --- fold time into lanes: [B, T, F] -> [B*t_sb, fold*F] ---
    target_t = t_sb * fold
    pad_r = target_t - (left + T)
    if pad_r >= 0:
        x_t = jnp.pad(x, ((0, 0), (left, pad_r), (0, 0)))
    else:
        # extra tail frames are provably never read by any valid output row
        x_t = jnp.pad(x, ((0, 0), (left, 0), (0, 0)))[:, :target_t, :]
    x_f = x_t.reshape(B, t_sb, gf).reshape(B * t_sb, gf)

    # --- fold batch into sublanes and tile over packed output rows ---
    m_total = B * t_sb
    tm = min(tile_rows, m_total)
    n_tiles = pl.cdiv(m_total, tm)
    m_pad = n_tiles * tm
    x_f = jnp.pad(x_f, ((0, m_pad + halo - m_total), (0, 0))).astype(compute_dtype)

    # overlapping input tiles with an (n_sb-1)-row halo, built once in the wrapper
    row_idx = jnp.arange(n_tiles)[:, None] * tm + jnp.arange(tm + halo)[None, :]
    x_tiles = jnp.take(x_f, row_idx, axis=0)          # [n_tiles, tm+halo, gf]

    # --- packed weight [n_sb, fold*F, pack*O] and bias [1, pack*O] ---
    w_kfo = jnp.transpose(weight, (2, 1, 0))          # [K, F, O]
    w_big = jnp.zeros((n_sb, fold, F, pack, O), weight.dtype)
    for j in range(n_sb):
        for g in range(fold):
            for q in range(pack):
                k = j * fold + g - q * stride
                if 0 <= k < kernel_size:
                    w_big = w_big.at[j, g, :, q, :].set(w_kfo[k])
    w_big = w_big.reshape(n_sb, gf, po).astype(compute_dtype)
    b_big = jnp.tile(bias.astype(jnp.float32), pack).reshape(1, po)

    out_tiles = pl.pallas_call(
        partial(_window_conv_kernel, n_sb=n_sb),
        out_shape=jax.ShapeDtypeStruct((n_tiles, tm, po), out_dtype),
        grid_spec=pltpu.PrefetchScalarGridSpec(
            num_scalar_prefetch=0,
            grid=(n_tiles,),
            in_specs=[
                pl.BlockSpec((None, tm + halo, gf), lambda i: (i, 0, 0)),
                pl.BlockSpec((n_sb, gf, po), lambda i: (0, 0, 0)),
                pl.BlockSpec((1, po), lambda i: (0, 0)),
            ],
            out_specs=pl.BlockSpec((None, tm, po), lambda i: (i, 0, 0)),
        ),
        compiler_params=pltpu.CompilerParams(
            dimension_semantics=("parallel",)),
    )(x_tiles, w_big, b_big)

    # un-tile, un-pack: [n_tiles, tm, pack*O] -> [B, t_out, O]
    out = out_tiles.reshape(m_pad, po)[:m_total]
    out = out.reshape(B, t_sb * pack, O)[:, :t_out, :]

    # mask_pool(seq_mask, kernel_size=1, stride=stride, padding=0) == strided subsample
    t_mask_out = (T - 1) // stride + 1
    mask_out = sequence_mask[:, ::stride][:, :t_mask_out]

    # TODO(synk): torch.nn.Dropout is stochastic in train mode; applied as identity (eval).
    return out, mask_out


if __name__ == "__main__":
    key = jax.random.PRNGKey(0)
    kx, kw, kb = jax.random.split(key, 3)

    B, T = 2, 16
    x = jax.random.normal(kx, (B, T, INPUT_DIM), jnp.float32)
    lengths = jnp.array([16, 11], jnp.int32)
    sequence_mask = jnp.arange(T)[None, :] < lengths[:, None]

    # Deterministic Conv1d parameters (torch layout: weight [O, F, K], bias [O]).
    fan_in = INPUT_DIM * KERNEL_SIZE
    bound = float(1.0 / (fan_in ** 0.5))
    weight = jax.random.uniform(kw, (OUTPUT_DIM, INPUT_DIM, KERNEL_SIZE),
                                jnp.float32, -bound, bound)
    bias = jax.random.uniform(kb, (OUTPUT_DIM,), jnp.float32, -bound, bound)

    out, mask_out = window_convolution_frontend(
        x, sequence_mask, weight, bias, kernel_size=KERNEL_SIZE, stride=STRIDE,
        compute_dtype=jnp.bfloat16)
    out = jax.block_until_ready(out)
    mask_out = jax.block_until_ready(mask_out)

    # Independent reference: lax 1-D conv (NCW, like torch) on the same bf16-rounded
    # operands (f32 accumulation), then bias + ReLU in f32.
    left = (KERNEL_SIZE - 1) // 2
    right = KERNEL_SIZE - 1 - left
    x_pad = jnp.pad(x, ((0, 0), (left, right), (0, 0)))
    x_q = x_pad.astype(jnp.bfloat16).astype(jnp.float32)
    w_q = weight.astype(jnp.bfloat16).astype(jnp.float32)
    ref = jax.lax.conv_general_dilated(
        jnp.transpose(x_q, (0, 2, 1)), w_q,
        window_strides=(STRIDE,), padding="VALID",
        dimension_numbers=("NCH", "OIH", "NCH"),
        precision=jax.lax.Precision.HIGHEST)
    ref = jnp.transpose(ref, (0, 2, 1)) + bias[None, None, :]
    ref = jnp.maximum(ref, 0.0).astype(x.dtype)

    ref_mask = sequence_mask[:, ::STRIDE][:, :mask_out.shape[1]]

    assert out.shape == ref.shape, (out.shape, ref.shape)
    assert jnp.allclose(out, ref, atol=2e-3, rtol=2e-3), "conv output mismatch"
    assert jnp.array_equal(mask_out, ref_mask), "mask mismatch"
    print("KERNEL_OK")
</pallas_src>

<mosaic_0001>
module attributes {stable_mosaic.version = 11 : i64} {
  func.func @_window_conv_kernel(%arg0: i32, %arg1: memref<1x11x128xbf16, #tpu.memory_space<vmem>>, %arg2: memref<2x128x128xbf16, #tpu.memory_space<vmem>>, %arg3: memref<1x128xf32, #tpu.memory_space<vmem>>, %arg4: memref<1x10x128xf32, #tpu.memory_space<vmem>>) attributes {dimension_semantics = [#tpu.dimension_semantics<parallel>], iteration_bounds = array<i64: 1>, scalar_prefetch = 0 : i64, scratch_operands = 0 : i64, tpu.core_type = #tpu.core_type<tc>, window_params = [{transform_indices = @transform_0, window_bounds = array<i64: 1, 11, 128>}, {pipeline_mode = #tpu.pipeline_mode<synchronous>, transform_indices = @transform_1, window_bounds = array<i64: 2, 128, 128>}, {pipeline_mode = #tpu.pipeline_mode<synchronous>, transform_indices = @transform_2, window_bounds = array<i64: 1, 128>}, {transform_indices = @transform_3, window_bounds = array<i64: 1, 10, 128>}]} {
    %cst = arith.constant 0.000000e+00 : f32
    %0 = vector.broadcast %cst : f32 to vector<10x128xf32>
    %c0 = arith.constant 0 : index
    %c0_0 = arith.constant 0 : index
    %c0_1 = arith.constant 0 : index
    %1 = vector.load %arg1[%c0, %c0_0, %c0_1] : memref<1x11x128xbf16, #tpu.memory_space<vmem>>, vector<1x10x128xbf16>
    %2 = vector.shape_cast %1 : vector<1x10x128xbf16> to vector<10x128xbf16>
    %c0_2 = arith.constant 0 : index
    %c0_3 = arith.constant 0 : index
    %c0_4 = arith.constant 0 : index
    %3 = vector.load %arg2[%c0_2, %c0_3, %c0_4] : memref<2x128x128xbf16, #tpu.memory_space<vmem>>, vector<1x128x128xbf16>
    %4 = vector.shape_cast %3 : vector<1x128x128xbf16> to vector<128x128xbf16>
    %cst_5 = arith.constant dense<0.000000e+00> : vector<10x128xf32>
    %5 = tpu.matmul %2, %4, %cst_5 {dimension_numbers = #tpu.dot_dimension_numbers<[1], [0], [0], [1], [0, 0, 1, 1], [], []>} : vector<10x128xbf16>, vector<128x128xbf16>, vector<10x128xf32> -> vector<10x128xf32>
    %6 = arith.addf %0, %5 : vector<10x128xf32>
    %c0_6 = arith.constant 0 : index
    %c1 = arith.constant 1 : index
    %c0_7 = arith.constant 0 : index
    %7 = vector.load %arg1[%c0_6, %c1, %c0_7] : memref<1x11x128xbf16, #tpu.memory_space<vmem>>, vector<1x10x128xbf16>
    %8 = vector.shape_cast %7 : vector<1x10x128xbf16> to vector<10x128xbf16>
    %c1_8 = arith.constant 1 : index
    %c0_9 = arith.constant 0 : index
    %c0_10 = arith.constant 0 : index
    %9 = vector.load %arg2[%c1_8, %c0_9, %c0_10] : memref<2x128x128xbf16, #tpu.memory_space<vmem>>, vector<1x128x128xbf16>
    %10 = vector.shape_cast %9 : vector<1x128x128xbf16> to vector<128x128xbf16>
    %cst_11 = arith.constant dense<0.000000e+00> : vector<10x128xf32>
    %11 = tpu.matmul %8, %10, %cst_11 {dimension_numbers = #tpu.dot_dimension_numbers<[1], [0], [0], [1], [0, 0, 1, 1], [], []>} : vector<10x128xbf16>, vector<128x128xbf16>, vector<10x128xf32> -> vector<10x128xf32>
    %12 = arith.addf %6, %11 : vector<10x128xf32>
    %c0_12 = arith.constant 0 : index
    %c0_13 = arith.constant 0 : index
    %13 = vector.load %arg3[%c0_12, %c0_13] : memref<1x128xf32, #tpu.memory_space<vmem>>, vector<1x128xf32>
    %14 = vector.broadcast %13 : vector<1x128xf32> to vector<10x128xf32>
    %15 = arith.addf %12, %14 : vector<10x128xf32>
    %cst_14 = arith.constant 0.000000e+00 : f32
    %16 = vector.broadcast %cst_14 : f32 to vector<10x128xf32>
    %17 = arith.maximumf %15, %16 : vector<10x128xf32>
    %c0_15 = arith.constant 0 : index
    %c0_16 = arith.constant 0 : index
    %c0_17 = arith.constant 0 : index
    %18 = vector.load %arg4[%c0_15, %c0_16, %c0_17] : memref<1x10x128xf32, #tpu.memory_space<vmem>>, vector<1x10x128xf32>
    %19 = vector.shape_cast %18 : vector<1x10x128xf32> to vector<10x128xf32>
    %20 = vector.shape_cast %17 : vector<10x128xf32> to vector<1x10x128xf32>
    tpu.vector_store %arg4[%c0_15, %c0_16, %c0_17], %20 {strides = array<i32>} : memref<1x10x128xf32, #tpu.memory_space<vmem>>, vector<1x10x128xf32>,
    return
  }
  func.func @transform_0(%arg0: i32) -> (i32, i32, i32) {
    %c0_i32 = arith.constant 0 : i32
    %c0_i32_0 = arith.constant 0 : i32
    %c0_i32_1 = arith.constant 0 : i32
    return %arg0, %c0_i32, %c0_i32_0 : i32, i32, i32
  }
  func.func @transform_1(%arg0: i32) -> (i32, i32, i32) {
    %c0_i32 = arith.constant 0 : i32
    %c0_i32_0 = arith.constant 0 : i32
    %c0_i32_1 = arith.constant 0 : i32
    %c0_i32_2 = arith.constant 0 : i32
    return %c0_i32, %c0_i32_0, %c0_i32_1 : i32, i32, i32
  }
  func.func @transform_2(%arg0: i32) -> (i32, i32) {
    %c0_i32 = arith.constant 0 : i32
    %c0_i32_0 = arith.constant 0 : i32
    %c0_i32_1 = arith.constant 0 : i32
    return %c0_i32, %c0_i32_0 : i32, i32
  }
  func.func @transform_3(%arg0: i32) -> (i32, i32, i32) {
    %c0_i32 = arith.constant 0 : i32
    %c0_i32_0 = arith.constant 0 : i32
    %c0_i32_1 = arith.constant 0 : i32
    return %arg0, %c0_i32, %c0_i32_0 : i32, i32, i32
  }
}

</mosaic_0001>

<llo_original>
// kernel: tpu_custom_call.1
$region0: #{tpu_custom_call.1}
  #allocation0 [shape = 'u32[]', space=smem, size = 0x4, offset = 0x4, fixed_abs, tag = 'smem constant byte address 0x4 - core index']
  #allocation1 [shape = 'u32[72,128]{1,0:T(1,128)}', space=vmem, size = 0x9000, scoped, tag = 'internal scratch']
  %s0 = inlined_call_operand.hbm [shape: bf16[1,11,128], index: 0, kind: input, shape index: {}]
  %s1 = inlined_call_operand.hbm [shape: bf16[2,128,128], index: 1, kind: input, shape index: {}]
  %s2 = inlined_call_operand.vmem [shape: f32[1,128], index: 2, kind: input, shape index: {}]
  %s3 = inlined_call_operand.vmem [shape: f32[1,10,128], index: 3, kind: output, shape index: {}]
  %s4 = sld [smem:[#allocation0]]
  $region30: #{tpu_custom_call.1} parent=0
    _
  %s6 = ssub.s32 1, %s4
  %s7 = scalar_select 0, %s6, %s4
  $region1: #{tpu_custom_call.1} parent=0
    #allocation2 [shape = 'u8[4096]{0}', space=vmem, size = 0x1000, scoped, tag = 'input window, operand 0, single buffered']
    #allocation3 [shape = 's32[1]{0}', space=sflag, size = 0x4, scoped, tag = 'scoped memory for tpu_custom_call.1']
    #allocation4 [shape = 'u8[65536]{0}', space=vmem, size = 0x10000, scoped, tag = 'input window, operand 1, single buffered']
    #allocation5 [shape = 's32[1]{0}', space=sflag, size = 0x4, scoped, tag = 'scoped memory for tpu_custom_call.1']
    %8 = vsyncpa [#allocation3], 0
    %9 = vsyncpa [#allocation5], 0
    // Predicated region
    $region2: #{tpu_custom_call.1} parent=1 // pred_check
      _
    $region3: #{tpu_custom_call.1} parent=1 // pred_check_branch
      %11 = sbr.rel (0) target = $region5
    $region4: #{tpu_custom_call.1} parent=1 // pred_region
      %13 = vsyncadd [#allocation3], 0
      %s14 = sshll.u32 %s0, 4
      %s15 = int_to_ptr.hbm [resolvable:$true] %s14
      %s16 = sshll.u32 [#allocation2], 4
      %s17 = int_to_ptr.vmem [resolvable:$true] %s16
      %22 = dma.hbm_to_vmem [thread:$0]  %s15, 128, %s17, [#allocation3], 64, 64, 4
    $region5: #{tpu_custom_call.1} parent=1 // pred_fallthru
      _
    // Predicated region
    $region6: #{tpu_custom_call.1} parent=1 // pred_check
      _
    $region7: #{tpu_custom_call.1} parent=1 // pred_check_branch
      %24 = sbr.rel (0) target = $region9
    $region8: #{tpu_custom_call.1} parent=1 // pred_region
      %26 = vsyncadd [#allocation5], 0
      %s27 = sshll.u32 %s1, 4
      %s28 = int_to_ptr.hbm [resolvable:$true] %s27
      %s29 = sshll.u32 [#allocation4], 4
      %s30 = int_to_ptr.vmem [resolvable:$true] %s29
      %35 = dma.hbm_to_vmem [thread:$0]  %s28, 2048, %s30, [#allocation5], 64, 64, 4
    $region9: #{tpu_custom_call.1} parent=1 // pred_fallthru
      _
    // Predicated region
    $region10: #{tpu_custom_call.1} parent=1 // pred_check
      _
    $region11: #{tpu_custom_call.1} parent=1 // pred_check_branch
      %37 = sbr.rel (0) target = $region13
    $region12: #{tpu_custom_call.1} parent=1 // pred_region
      _
    $region13: #{tpu_custom_call.1} parent=1 // pred_fallthru
      _
    // Predicated region
    $region14: #{tpu_custom_call.1} parent=1 // pred_check
      _
    $region15: #{tpu_custom_call.1} parent=1 // pred_check_branch
      %39 = sbr.rel (0) target = $region17
    $region16: #{tpu_custom_call.1} parent=1 // pred_region
      %41 = dma.done [#allocation3], 128
    $region17: #{tpu_custom_call.1} parent=1 // pred_fallthru
      _
    // Predicated region
    $region18: #{tpu_custom_call.1} parent=1 // pred_check
      _
    $region19: #{tpu_custom_call.1} parent=1 // pred_check_branch
      %43 = sbr.rel (0) target = $region21
    $region20: #{tpu_custom_call.1} parent=1 // pred_region
      %45 = dma.done [#allocation5], 2048
    $region21: #{tpu_custom_call.1} parent=1 // pred_fallthru
      _
    %v46 = vld [vmem:[#allocation2] sm:$0xf]
    %v47 = vld [vmem:[#allocation2 + $0x4] sm:$0x1]
    %v48 = vld [vmem:[#allocation4] sm:$0xf]
    %v49 = vld [vmem:[#allocation4 + $0x4] sm:$0xf]
    %v50 = vld [vmem:[#allocation4 + $0x8] sm:$0xf]
    %v51 = vld [vmem:[#allocation4 + $0xc] sm:$0xf]
    %v52 = vld [vmem:[#allocation4 + $0x10] sm:$0xf]
    %v53 = vld [vmem:[#allocation4 + $0x14] sm:$0xf]
    %v54 = vld [vmem:[#allocation4 + $0x18] sm:$0xf]
    %v55 = vld [vmem:[#allocation4 + $0x1c] sm:$0xf]
    %v56 = vld [vmem:[#allocation4 + $0x20] sm:$0xf]
    %v57 = vld [vmem:[#allocation4 + $0x24] sm:$0xf]
    %v58 = vld [vmem:[#allocation4 + $0x28] sm:$0xf]
    %v59 = vld [vmem:[#allocation4 + $0x2c] sm:$0xf]
    %v60 = vld [vmem:[#allocation4 + $0x30] sm:$0xf]
    %v61 = vld [vmem:[#allocation4 + $0x34] sm:$0xf]
    %v62 = vld [vmem:[#allocation4 + $0x38] sm:$0xf]
    %v63 = vld [vmem:[#allocation4 + $0x3c] sm:$0xf]
    %v64 = vld [vmem:[#allocation2 + $0x4] sm:$0x3]
    %s65 = scalar_lea.vmem [#allocation4], 64
    %v66 = vld [vmem:[%s65] sm:$0xf]
    %v67 = vld [vmem:[%s65 + $0x4] sm:$0xf]
    %v68 = vld [vmem:[%s65 + $0x8] sm:$0xf]
    %v69 = vld [vmem:[%s65 + $0xc] sm:$0xf]
    %v70 = vld [vmem:[%s65 + $0x10] sm:$0xf]
    %v71 = vld [vmem:[%s65 + $0x14] sm:$0xf]
    %v72 = vld [vmem:[%s65 + $0x18] sm:$0xf]
    %v73 = vld [vmem:[%s65 + $0x1c] sm:$0xf]
    %v74 = vld [vmem:[%s65 + $0x20] sm:$0xf]
    %v75 = vld [vmem:[%s65 + $0x24] sm:$0xf]
    %v76 = vld [vmem:[%s65 + $0x28] sm:$0xf]
    %v77 = vld [vmem:[%s65 + $0x2c] sm:$0xf]
    %v78 = vld [vmem:[%s65 + $0x30] sm:$0xf]
    %v79 = vld [vmem:[%s65 + $0x34] sm:$0xf]
    %v80 = vld [vmem:[%s65 + $0x38] sm:$0xf]
    %v81 = vld [vmem:[%s65 + $0x3c] sm:$0xf]
    %v84 = vunpack.c.l.b16 %v46
    %v85 = vunpack.c.l.b16 %v64
    %v86 = vpack.c.b16 %v85, %v84
    %v88 = vshrl.u32 %v86, 16
    %v90 = vshll.u32 %v86, 16
    %v92 = vrot.slane %v90, 1
    %v93 = vor.u32 %v88, %v92
    %v111 = vunpack.c.l.b16 %v66
    %v112 = vunpack.c.l.b16 %v67
    %v113 = vunpack.c.l.b16 %v68
    %v114 = vunpack.c.l.b16 %v69
    %v115 = vunpack.c.l.b16 %v70
    %v116 = vunpack.c.l.b16 %v71
    %v117 = vunpack.c.l.b16 %v72
    %v118 = vunpack.c.l.b16 %v73
    %v119 = vunpack.c.l.b16 %v74
    %v120 = vunpack.c.l.b16 %v75
    %v121 = vunpack.c.l.b16 %v76
    %v122 = vunpack.c.l.b16 %v77
    %v123 = vunpack.c.l.b16 %v78
    %v124 = vunpack.c.l.b16 %v79
    %v125 = vunpack.c.l.b16 %v80
    %v126 = vunpack.c.l.b16 %v81
    %v127 = vpack.c.b16 %v112, %v111
    %v128 = vpack.c.b16 %v114, %v113
    %v129 = vpack.c.b16 %v116, %v115
    %v130 = vpack.c.b16 %v118, %v117
    %v131 = vpack.c.b16 %v120, %v119
    %v132 = vpack.c.b16 %v122, %v121
    %v133 = vpack.c.b16 %v124, %v123
    %v134 = vpack.c.b16 %v126, %v125
    %143 = vmatpush.bf16.msra.mxu0 %v134
    %144 = vmatpush.bf16.msra.mxu0 %v133
    %145 = vmatpush.bf16.msra.mxu0 %v132
    %146 = vmatpush.bf16.msra.mxu0 %v131
    %147 = vmatpush.bf16.msra.mxu0 %v130
    %148 = vmatpush.bf16.msra.mxu0 %v129
    %149 = vmatpush.bf16.msra.mxu0 %v128
    %150 = vmatpush.bf16.msra.mxu0 %v127
    %151 = vmatmul.bf16.gmra.mxu0 %v93
    %v152 = vpop.f32.mrf.mxu0
    %v153 = vadd.f32 0.0, %v152
    %v154 = vpop.f32.mrf.mxu0
    %v155 = vadd.f32 0.0, %v154
    %156 = vdwg.mxu0
    %v158 = vunpack.c.l.b16 %v47
    %v159 = vpack.c.b16 %v158, %v84
    %v177 = vunpack.c.l.b16 %v48
    %v178 = vunpack.c.l.b16 %v49
    %v179 = vunpack.c.l.b16 %v50
    %v180 = vunpack.c.l.b16 %v51
    %v181 = vunpack.c.l.b16 %v52
    %v182 = vunpack.c.l.b16 %v53
    %v183 = vunpack.c.l.b16 %v54
    %v184 = vunpack.c.l.b16 %v55
    %v185 = vunpack.c.l.b16 %v56
    %v186 = vunpack.c.l.b16 %v57
    %v187 = vunpack.c.l.b16 %v58
    %v188 = vunpack.c.l.b16 %v59
    %v189 = vunpack.c.l.b16 %v60
    %v190 = vunpack.c.l.b16 %v61
    %v191 = vunpack.c.l.b16 %v62
    %v192 = vunpack.c.l.b16 %v63
    %v193 = vpack.c.b16 %v178, %v177
    %v194 = vpack.c.b16 %v180, %v179
    %v195 = vpack.c.b16 %v182, %v181
    %v196 = vpack.c.b16 %v184, %v183
    %v197 = vpack.c.b16 %v186, %v185
    %v198 = vpack.c.b16 %v188, %v187
    %v199 = vpack.c.b16 %v190, %v189
    %v200 = vpack.c.b16 %v192, %v191
    %209 = vmatpush.bf16.msra.mxu0 %v200
    %210 = vmatpush.bf16.msra.mxu0 %v199
    %211 = vmatpush.bf16.msra.mxu0 %v198
    %212 = vmatpush.bf16.msra.mxu0 %v197
    %213 = vmatpush.bf16.msra.mxu0 %v196
    %214 = vmatpush.bf16.msra.mxu0 %v195
    %215 = vmatpush.bf16.msra.mxu0 %v194
    %216 = vmatpush.bf16.msra.mxu0 %v193
    %217 = vmatmul.bf16.gmra.mxu0 %v159
    %v218 = vpop.f32.mrf.mxu0
    %v219 = vadd.f32 %v153, %v218
    %v220 = vpop.f32.mrf.mxu0
    %v221 = vadd.f32 %v155, %v220
    %222 = vdwg.mxu0
    %v223 = vld [vmem:[%s2] sm:$0x1]
    %v225 = vperm.slane %v223, 0
    %v227 = vadd.f32 %v219, %v225
    %v228 = vadd.f32 %v221, %v225
    %v229 = vmax.f32 %v227, 0.0
    %v230 = vmax.f32 %v228, 0.0
    %231 = vst [vmem:[%s3] sm:$0xff] %v229
    %232 = vst [vmem:[%s3 + $0x8] sm:$0x3] %v230
    // Predicated region
    $region22: #{tpu_custom_call.1} parent=1 // pred_check
      _
    $region23: #{tpu_custom_call.1} parent=1 // pred_check_branch
      %234 = sbr.rel (0) target = $region25
    $region24: #{tpu_custom_call.1} parent=1 // pred_region
      _
    $region25: #{tpu_custom_call.1} parent=1 // pred_fallthru
      _
    // Predicated region
    $region26: #{tpu_custom_call.1} parent=1 // pred_check
      _
    $region27: #{tpu_custom_call.1} parent=1 // pred_check_branch
      %236 = sbr.rel (0) target = $region29
    $region28: #{tpu_custom_call.1} parent=1 // pred_region
      _
    $region29: #{tpu_custom_call.1} parent=1 // pred_fallthru
      _
    %237 = vsyncpa [#allocation3], 1
    %238 = vsyncpa [#allocation5], 1

</llo_original>
